<compile_context>
chip_gen: v7x
topology: tpu7x:2x2x1
jax: 0.10.0
libtpu: 0.0.40
codegen_flags: <defaults>
</compile_context>

<pallas_src>
import math

import jax
import jax.numpy as jnp
from jax.experimental import pallas as pl
from jax.experimental.pallas import tpu as pltpu

_BLOCK_BUDGET_BYTES = 8 * 1024 * 1024  # target double-buffered working set per grid step


def _concat_kernel(*refs):
    """refs = (*input_refs, out_ref); concat along axis 1 of each block."""
    *in_refs, o_ref = refs
    nd = len(o_ref.shape)
    off = 0
    for r in in_refs:
        c = r.shape[1]
        idx = (slice(None), slice(off, off + c)) + (slice(None),) * (nd - 2)
        o_ref[idx] = r[...]
        off += c


def _round_up(x, m):
    return (x + m - 1) // m * m


def concat(xs, dimension=1):
    """Pallas concat of a list/tuple of arrays along `dimension` (any rank)."""
    xs = list(xs)
    assert len(xs) >= 1, "Concat needs at least one input"

    shape0 = xs[0].shape
    nd = len(shape0)
    d = dimension % nd
    for x in xs:
        assert len(x.shape) == nd, "rank mismatch in Concat inputs"
        for ax in range(nd):
            if ax != d:
                assert x.shape[ax] == shape0[ax], "non-concat dims must match"

    dtype = jnp.result_type(*xs)
    itemsize = jnp.dtype(dtype).itemsize

    c_total = sum(x.shape[d] for x in xs)
    out_shape = shape0[:d] + (c_total,) + shape0[d + 1:]

    # Zero-width inputs are legal for torch.cat; drop them.
    xs = [x for x in xs if x.shape[d] > 0]
    if len(xs) == 0 or math.prod(out_shape) == 0:
        return jnp.zeros(out_shape, dtype)
    if len(xs) == 1:
        return xs[0].astype(dtype).reshape(out_shape)

    xs = [x.astype(dtype) for x in xs]
    c_sizes = [x.shape[d] for x in xs]
    P = math.prod(shape0[:d])          # leading dims (1 if d == 0)
    Q = math.prod(shape0[d + 1:])      # trailing dims (1 if d == last)

    total_bytes = 2 * P * c_total * Q * itemsize   # read once + write once
    cost = pl.CostEstimate(flops=0, transcendentals=0, bytes_accessed=total_bytes)

    # Sublane tile multiple for this dtype (8 for f32, 16 for bf16, 32 for int8).
    sub_mult = 8 * max(1, 4 // itemsize)

    # Lane-concat path: small trailing extent -> fuse C and Q into one lane axis.
    min_tp = P if P <= sub_mult else sub_mult
    row_bytes = 4 * c_total * Q * itemsize         # (inputs + output) x double-buffer, per row
    use_lane_path = (Q < 128) and (row_bytes * min_tp <= _BLOCK_BUDGET_BYTES)

    if use_lane_path:
        k_sizes = [c * Q for c in c_sizes]
        k_total = c_total * Q
        args = [x.reshape(P, k) for x, k in zip(xs, k_sizes)]

        if P <= sub_mult:
            TP = P
        else:
            tp_cap = _BLOCK_BUDGET_BYTES // max(row_bytes, 1)
            TP = max(sub_mult, tp_cap // sub_mult * sub_mult)
            TP = min(TP, _round_up(P, sub_mult), 2048)

        grid = (pl.cdiv(P, TP),)
        in_specs = [pl.BlockSpec((TP, k), lambda p: (p, 0)) for k in k_sizes]
        out_specs = pl.BlockSpec((TP, k_total), lambda p: (p, 0))
        dims = ("parallel",)
        out_shape_view = (P, k_total)
        block_bytes = 2 * k_total * TP * itemsize
    else:
        # General path: (P, C_i, Q) blocks, concat on the sublane axis,
        # lane-dense TQ tiles, TP rows per step to amortize per-step overhead.
        args = [x.reshape(P, c, Q) for x, c in zip(xs, c_sizes)]

        col_bytes = 4 * c_total * itemsize         # per (TP*TQ) element, dbl-buffered in+out
        if Q <= 128:
            TQ = Q
        else:
            TQ = max(128, _BLOCK_BUDGET_BYTES // max(col_bytes, 1) // 128 * 128)
            TQ = min(TQ, _round_up(Q, 128), 8192)
        remaining = _BLOCK_BUDGET_BYTES // max(col_bytes * TQ, 1)
        TP = max(1, min(P, remaining, 256))

        grid = (pl.cdiv(P, TP), pl.cdiv(Q, TQ))
        in_specs = [pl.BlockSpec((TP, c, TQ), lambda p, q: (p, 0, q)) for c in c_sizes]
        out_specs = pl.BlockSpec((TP, c_total, TQ), lambda p, q: (p, 0, q))
        dims = ("parallel", "parallel")
        out_shape_view = (P, c_total, Q)
        block_bytes = 2 * c_total * TP * TQ * itemsize

    # Double-buffered blocks + headroom; cap at 64 MiB (v7x physical VMEM).
    vmem_limit = int(min(64 * 2**20, max(16 * 2**20, 2 * block_bytes + (2 << 20))))

    out = pl.pallas_call(
        _concat_kernel,
        out_shape=jax.ShapeDtypeStruct(out_shape_view, dtype),
        grid_spec=pltpu.PrefetchScalarGridSpec(
            num_scalar_prefetch=0,
            grid=grid,
            in_specs=in_specs,
            out_specs=out_specs,
        ),
        compiler_params=pltpu.CompilerParams(
            dimension_semantics=dims,
            vmem_limit_bytes=vmem_limit,
        ),
        cost_estimate=cost,
    )(*args)

    return out.reshape(out_shape)


class Concat:
    """Mirror of the PyTorch Concat module (no parameters)."""

    def __init__(self, dimension=1):
        self.d = dimension

    def __call__(self, x):
        return concat(x, self.d)


if __name__ == "__main__":
    key = jax.random.PRNGKey(0)
    k0, k1, k2 = jax.random.split(key, 3)

    # Small NCHW inputs: channel concat (dim=1), batch=2, spatial=16x16.
    x0 = jax.random.normal(k0, (2, 4, 16, 16), dtype=jnp.float32)
    x1 = jax.random.normal(k1, (2, 3, 16, 16), dtype=jnp.float32)
    x2 = jax.random.normal(k2, (2, 5, 16, 16), dtype=jnp.float32)

    module = Concat(dimension=1)
    out = jax.block_until_ready(module([x0, x1, x2]))
    ref = jnp.concatenate([x0, x1, x2], axis=1)
    assert out.shape == (2, 12, 16, 16), f"bad shape {out.shape}"
    assert out.dtype == ref.dtype
    assert jnp.array_equal(out, ref), "concat mismatch vs jnp.concatenate (dim=1)"

    # Last-dim concat exercises the lane-concat path.
    y = jax.block_until_ready(concat([x0, x0], dimension=3))
    assert jnp.array_equal(y, jnp.concatenate([x0, x0], axis=3)), "dim=3 mismatch"

    # First-dim concat and a bf16 run for dtype/layout coverage.
    z = jax.block_until_ready(concat([x0, x0], dimension=0))
    assert jnp.array_equal(z, jnp.concatenate([x0, x0], axis=0)), "dim=0 mismatch"

    b0 = x0.astype(jnp.bfloat16)
    b1 = x1.astype(jnp.bfloat16)
    w = jax.block_until_ready(concat([b0, b1], dimension=1))
    assert jnp.array_equal(w, jnp.concatenate([b0, b1], axis=1)), "bf16 mismatch"

    print("KERNEL_OK")
</pallas_src>

<mosaic_0001>
module attributes {stable_mosaic.version = 11 : i64} {
  func.func @_concat_kernel(%arg0: i32, %arg1: i32, %arg2: memref<2x4x256xf32, #tpu.memory_space<vmem>>, %arg3: memref<2x3x256xf32, #tpu.memory_space<vmem>>, %arg4: memref<2x5x256xf32, #tpu.memory_space<vmem>>, %arg5: memref<2x12x256xf32, #tpu.memory_space<vmem>>) attributes {dimension_semantics = [#tpu.dimension_semantics<parallel>, #tpu.dimension_semantics<parallel>], iteration_bounds = array<i64: 1, 1>, scalar_prefetch = 0 : i64, scratch_operands = 0 : i64, tpu.core_type = #tpu.core_type<tc>, window_params = [{transform_indices = @transform_0, window_bounds = array<i64: 2, 4, 256>}, {transform_indices = @transform_1, window_bounds = array<i64: 2, 3, 256>}, {transform_indices = @transform_2, window_bounds = array<i64: 2, 5, 256>}, {transform_indices = @transform_3, window_bounds = array<i64: 2, 12, 256>}]} {
    %c0 = arith.constant 0 : index
    %c0_0 = arith.constant 0 : index
    %c0_1 = arith.constant 0 : index
    %0 = vector.load %arg2[%c0, %c0_0, %c0_1] : memref<2x4x256xf32, #tpu.memory_space<vmem>>, vector<2x4x256xf32>
    %c0_2 = arith.constant 0 : index
    %c0_3 = arith.constant 0 : index
    %c0_4 = arith.constant 0 : index
    %1 = vector.load %arg5[%c0_2, %c0_3, %c0_4] : memref<2x12x256xf32, #tpu.memory_space<vmem>>, vector<2x4x256xf32>
    tpu.vector_store %arg5[%c0_2, %c0_3, %c0_4], %0 {strides = array<i32>} : memref<2x12x256xf32, #tpu.memory_space<vmem>>, vector<2x4x256xf32>,
    %c0_5 = arith.constant 0 : index
    %c0_6 = arith.constant 0 : index
    %c0_7 = arith.constant 0 : index
    %2 = vector.load %arg3[%c0_5, %c0_6, %c0_7] : memref<2x3x256xf32, #tpu.memory_space<vmem>>, vector<2x3x256xf32>
    %c0_8 = arith.constant 0 : index
    %c4 = arith.constant 4 : index
    %c0_9 = arith.constant 0 : index
    %3 = vector.load %arg5[%c0_8, %c4, %c0_9] : memref<2x12x256xf32, #tpu.memory_space<vmem>>, vector<2x3x256xf32>
    tpu.vector_store %arg5[%c0_8, %c4, %c0_9], %2 {strides = array<i32>} : memref<2x12x256xf32, #tpu.memory_space<vmem>>, vector<2x3x256xf32>,
    %c0_10 = arith.constant 0 : index
    %c0_11 = arith.constant 0 : index
    %c0_12 = arith.constant 0 : index
    %4 = vector.load %arg4[%c0_10, %c0_11, %c0_12] : memref<2x5x256xf32, #tpu.memory_space<vmem>>, vector<2x5x256xf32>
    %c0_13 = arith.constant 0 : index
    %c7 = arith.constant 7 : index
    %c0_14 = arith.constant 0 : index
    %5 = vector.load %arg5[%c0_13, %c7, %c0_14] : memref<2x12x256xf32, #tpu.memory_space<vmem>>, vector<2x5x256xf32>
    tpu.vector_store %arg5[%c0_13, %c7, %c0_14], %4 {strides = array<i32>} : memref<2x12x256xf32, #tpu.memory_space<vmem>>, vector<2x5x256xf32>,
    return
  }
  func.func @transform_0(%arg0: i32, %arg1: i32) -> (i32, i32, i32) {
    %c0_i32 = arith.constant 0 : i32
    %c0_i32_0 = arith.constant 0 : i32
    return %arg0, %c0_i32, %arg1 : i32, i32, i32
  }
  func.func @transform_1(%arg0: i32, %arg1: i32) -> (i32, i32, i32) {
    %c0_i32 = arith.constant 0 : i32
    %c0_i32_0 = arith.constant 0 : i32
    return %arg0, %c0_i32, %arg1 : i32, i32, i32
  }
  func.func @transform_2(%arg0: i32, %arg1: i32) -> (i32, i32, i32) {
    %c0_i32 = arith.constant 0 : i32
    %c0_i32_0 = arith.constant 0 : i32
    return %arg0, %c0_i32, %arg1 : i32, i32, i32
  }
  func.func @transform_3(%arg0: i32, %arg1: i32) -> (i32, i32, i32) {
    %c0_i32 = arith.constant 0 : i32
    %c0_i32_0 = arith.constant 0 : i32
    return %arg0, %c0_i32, %arg1 : i32, i32, i32
  }
}

</mosaic_0001>

<llo_original>
// kernel: tpu_custom_call.1
$region0: #{tpu_custom_call.1}
  #allocation0 [shape = 'u32[]', space=smem, size = 0x4, offset = 0x4, fixed_abs, tag = 'smem constant byte address 0x4 - core index']
  #allocation1 [shape = 'u32[144,128]{1,0:T(1,128)}', space=vmem, size = 0x12000, scoped, tag = 'internal scratch']
  %s0 = inlined_call_operand.vmem [shape: f32[2,4,256], index: 0, kind: input, shape index: {}]
  %s1 = inlined_call_operand.vmem [shape: f32[2,3,256], index: 1, kind: input, shape index: {}]
  %s2 = inlined_call_operand.vmem [shape: f32[2,5,256], index: 2, kind: input, shape index: {}]
  %s3 = inlined_call_operand.vmem [shape: f32[2,12,256], index: 3, kind: output, shape index: {}]
  %s4 = sld [smem:[#allocation0]]
  $region22: #{tpu_custom_call.1} parent=0
    _
  %s6 = ssub.s32 1, %s4
  %s7 = scalar_select 0, %s6, %s4
  // Predicated region
  $region2: #{tpu_custom_call.1} parent=0 // pred_check
    _
  $region3: #{tpu_custom_call.1} parent=0 // pred_check_branch
    %9 = sbr.rel (0) target = $region5
  $region4: #{tpu_custom_call.1} parent=0 // pred_region
    _
  $region5: #{tpu_custom_call.1} parent=0 // pred_fallthru
    _
  // Predicated region
  $region6: #{tpu_custom_call.1} parent=0 // pred_check
    _
  $region7: #{tpu_custom_call.1} parent=0 // pred_check_branch
    %11 = sbr.rel (0) target = $region9
  $region8: #{tpu_custom_call.1} parent=0 // pred_region
    _
  $region9: #{tpu_custom_call.1} parent=0 // pred_fallthru
    _
  // Predicated region
  $region10: #{tpu_custom_call.1} parent=0 // pred_check
    _
  $region11: #{tpu_custom_call.1} parent=0 // pred_check_branch
    %13 = sbr.rel (0) target = $region13
  $region12: #{tpu_custom_call.1} parent=0 // pred_region
    _
  $region13: #{tpu_custom_call.1} parent=0 // pred_fallthru
    _
  %v14 = vld [vmem:[%s0] sm:$0xff]
  %v15 = vld [vmem:[%s0 + $0x8] sm:$0xff]
  %v18 = vcombine.high %v14, %v14
  %v19 = vcombine.high %v15, %v15
  %22 = vst [vmem:[%s3] sm:$0xf] %v14
  %23 = vst [vmem:[%s3 + $0x8] sm:$0xf] %v18
  %24 = vst [vmem:[%s3 + $0x20] sm:$0xf] %v15
  %25 = vst [vmem:[%s3 + $0x28] sm:$0xf] %v19
  %v26 = vld [vmem:[%s1] sm:$0x77]
  %v27 = vld [vmem:[%s1 + $0x8] sm:$0x77]
  %v30 = vcombine.low %v26, %v26
  %v31 = vcombine.low %v27, %v27
  %34 = vst [vmem:[%s3] sm:$0x70] %v30
  %35 = vst [vmem:[%s3 + $0x8] sm:$0x70] %v26
  %36 = vst [vmem:[%s3 + $0x20] sm:$0x70] %v31
  %37 = vst [vmem:[%s3 + $0x28] sm:$0x70] %v27
  %v38 = vld [vmem:[%s2] sm:$0x1f]
  %v39 = vld [vmem:[%s2 + $0x8] sm:$0x1f]
  %v40 = vld [vmem:[%s2 + $0x10] sm:$0x1f]
  %v41 = vld [vmem:[%s2 + $0x18] sm:$0x1f]
  %v46 = vrot.slane %v38, 1
  %v47 = vrot.slane %v39, 1
  %v48 = vrot.slane %v40, 1
  %v49 = vrot.slane %v41, 1
  %54 = vst [vmem:[%s3] sm:$0x80] %v46
  %55 = vst [vmem:[%s3 + $0x8] sm:$0x80] %v47
  %56 = vst [vmem:[%s3 + $0x10] sm:$0xf] %v46
  %57 = vst [vmem:[%s3 + $0x18] sm:$0xf] %v47
  %58 = vst [vmem:[%s3 + $0x20] sm:$0x80] %v48
  %59 = vst [vmem:[%s3 + $0x28] sm:$0x80] %v49
  %60 = vst [vmem:[%s3 + $0x30] sm:$0xf] %v48
  %61 = vst [vmem:[%s3 + $0x38] sm:$0xf] %v49
  // Predicated region
  $region14: #{tpu_custom_call.1} parent=0 // pred_check
    _
  $region15: #{tpu_custom_call.1} parent=0 // pred_check_branch
    %63 = sbr.rel (0) target = $region17
  $region16: #{tpu_custom_call.1} parent=0 // pred_region
    _
  $region17: #{tpu_custom_call.1} parent=0 // pred_fallthru
    _
  // Predicated region
  $region18: #{tpu_custom_call.1} parent=0 // pred_check
    _
  $region19: #{tpu_custom_call.1} parent=0 // pred_check_branch
    %65 = sbr.rel (0) target = $region21
  $region20: #{tpu_custom_call.1} parent=0 // pred_region
    _
  $region21: #{tpu_custom_call.1} parent=0 // pred_fallthru
    _

</llo_original>
